<compile_context>
chip_gen: v5e
topology: v5e:2x2
jax: 0.10.0
libtpu: 0.0.40
codegen_flags: <defaults>
</compile_context>

<pallas_src>
import functools

import jax
import jax.numpy as jnp
from jax.experimental import pallas as pl
from jax.experimental.pallas import tpu as pltpu

_LANE = 128


def _round_up(x: int, m: int) -> int:
    return (x + m - 1) // m * m


def _vmem_limit_bytes() -> int:
    # v5e/v6e have 128 MiB physical VMEM -> allow a large scoped limit there;
    # v7x only has 64 MiB, so stay conservative on it / unknown hardware.
    try:
        kind = jax.devices()[0].device_kind.lower()
    except Exception:  # pragma: no cover
        kind = ""
    if "v5" in kind or "v6" in kind:
        return 100 * 1024 * 1024
    return 48 * 1024 * 1024


# ---------------------------------------------------------------------------
# Fused kernel: time-blocked RNN recurrence + gated-conv epilogue per block.
# ---------------------------------------------------------------------------
def _rcnn_kernel(x_ref, wih_ref, whh_ref, b_ref, wconv_ref, o_ref,
                 h_ref, xp_ref, y_ref, *, tt, n, hp, ksize, pad):
    # x_ref    : (TT, N, Hp)    input time-block (compute dtype)
    # wih_ref  : (Hp, Hp)       W_ih^T (compute dtype), grid-invariant
    # whh_ref  : (Hp, Hp)       W_hh^T (compute dtype), grid-invariant
    # b_ref    : (1, Hp)        fused bias b_ih + b_hh (f32), grid-invariant
    # wconv_ref: (K, Hp, 2*Hp)  conv || gate weights (compute dtype), grid-invariant
    # o_ref    : (TT, N, Hp)    gated-conv output block
    # h_ref    : (N, Hp) f32    hidden state carried across grid steps
    # xp_ref   : (TT, N, Hp) f32  hoisted input projection for this block
    # y_ref    : (TT, N, Hp)    RNN outputs of this block (compute dtype)
    @pl.when(pl.program_id(0) == 0)
    def _():
        h_ref[...] = jnp.zeros_like(h_ref)

    # (1) Hoisted input projection: one large MXU matmul for the whole block,
    #     off the serial critical path.
    xp = jnp.dot(x_ref[...].reshape(tt * n, hp), wih_ref[...],
                 preferred_element_type=jnp.float32)
    xp_ref[...] = (xp + b_ref[...]).reshape(tt, n, hp)

    # (2) Sequential recurrence: only h @ W_hh^T + tanh per step.
    def step(t, carry):
        acc = xp_ref[t] + jnp.dot(h_ref[...].astype(whh_ref.dtype), whh_ref[...],
                                  preferred_element_type=jnp.float32)
        h_new = jnp.tanh(acc)
        h_ref[...] = h_new
        y_ref[t] = h_new.astype(y_ref.dtype)
        return carry

    jax.lax.fori_loop(0, tt, step, 0, unroll=True)

    # (3) Gated-conv epilogue over the whole block (conv axis == RNN batch
    #     axis N, fully resident in VMEM). K accumulating MXU dots with the
    #     conv and gate weights fused on the output dim; f32 accumulator.
    y = y_ref[...]                                           # (TT, N, Hp)
    if pad > 0:
        zrows = jnp.zeros((tt, pad, hp), y.dtype)
        yp = jnp.concatenate([zrows, y, zrows], axis=1)      # (TT, N + 2*pad, Hp)
    else:
        yp = y
    acc = jnp.zeros((tt * n, 2 * hp), jnp.float32)
    for j in range(ksize):
        tap = yp[:, j:j + n, :].reshape(tt * n, hp)
        acc += jnp.dot(tap, wconv_ref[j], preferred_element_type=jnp.float32)
    a = acc[:, :hp]
    g = acc[:, hp:]
    o_ref[...] = (a * jax.nn.sigmoid(g)).reshape(tt, n, hp).astype(o_ref.dtype)


def rcnn_forward(x, params, *, compute_dtype=jnp.bfloat16, time_block=16,
                 out_dtype=jnp.float32):
    """Full RCNN forward.

    x: (T, N, H) — T is the nn.RNN sequence axis, N its batch (and the conv
    axis), H the hidden/channel size. Weights in torch layouts:
      w_ih, w_hh: (H, H);  b_ih, b_hh: (H,);  w_cnn, w_gate: (H, H, K).
    Returns (T, N, H) in out_dtype.
    """
    T, N, H = x.shape
    K = params["w_cnn"].shape[-1]
    # PyTorch pad=(K-1)//2 is a "same" conv only for odd K.
    assert K % 2 == 1, "kernel_size must be odd for same-padding Conv1d"
    pad = (K - 1) // 2

    Hp = _round_up(max(H, _LANE), _LANE)     # lane-dense channel width
    dH = Hp - H
    TT = min(time_block, T)                  # time steps per grid iteration
    T_p = _round_up(T, TT)

    # Zero-padding keeps the extra channels exactly zero through the whole
    # recurrence (zero weights, zero bias) and the conv, so slicing at the
    # end is exact. Extra padded time steps are computed and discarded.
    x_p = jnp.pad(x, ((0, T_p - T), (0, 0), (0, dH))).astype(compute_dtype)
    wih_t = jnp.pad(params["w_ih"], ((0, dH), (0, dH))).T.astype(compute_dtype)
    whh_t = jnp.pad(params["w_hh"], ((0, dH), (0, dH))).T.astype(compute_dtype)
    bias = jnp.pad(params["b_ih"] + params["b_hh"],
                   (0, dH)).reshape(1, Hp).astype(jnp.float32)

    def _conv_w(w):       # torch (H_out, H_in, K) -> (K, Hp_in, Hp_out)
        wp = jnp.pad(w, ((0, dH), (0, dH), (0, 0)))
        return jnp.transpose(wp, (2, 1, 0))

    w_conv = jnp.concatenate(
        [_conv_w(params["w_cnn"]), _conv_w(params["w_gate"])],
        axis=-1).astype(compute_dtype)                       # (K, Hp, 2*Hp)

    kernel = functools.partial(_rcnn_kernel, tt=TT, n=N, hp=Hp, ksize=K, pad=pad)

    isz = jnp.dtype(compute_dtype).itemsize
    osz = jnp.dtype(out_dtype).itemsize
    cost = pl.CostEstimate(
        flops=4 * T_p * N * Hp * Hp * (1 + K),
        transcendentals=2 * T_p * N * Hp,
        bytes_accessed=(T_p * N * Hp + 2 * Hp * Hp + K * Hp * 2 * Hp) * isz
                       + Hp * 4 + T_p * N * Hp * osz,
    )

    out = pl.pallas_call(
        kernel,
        out_shape=jax.ShapeDtypeStruct((T_p, N, Hp), out_dtype),
        grid_spec=pltpu.PrefetchScalarGridSpec(
            num_scalar_prefetch=0,
            grid=(T_p // TT,),
            in_specs=[
                pl.BlockSpec((TT, N, Hp), lambda i: (i, 0, 0)),
                # Grid-invariant weights/bias (constant index_map -> fetched once).
                pl.BlockSpec((Hp, Hp), lambda i: (0, 0)),
                pl.BlockSpec((Hp, Hp), lambda i: (0, 0)),
                pl.BlockSpec((1, Hp), lambda i: (0, 0)),
                pl.BlockSpec((K, Hp, 2 * Hp), lambda i: (0, 0, 0)),
            ],
            out_specs=pl.BlockSpec((TT, N, Hp), lambda i: (i, 0, 0)),
            scratch_shapes=[
                pltpu.VMEM((N, Hp), jnp.float32),        # carried hidden state
                pltpu.VMEM((TT, N, Hp), jnp.float32),    # hoisted input projection
                pltpu.VMEM((TT, N, Hp), compute_dtype),  # block RNN outputs (conv input)
            ],
        ),
        compiler_params=pltpu.CompilerParams(
            dimension_semantics=("arbitrary",),          # sequential recurrence
            vmem_limit_bytes=_vmem_limit_bytes()),
        cost_estimate=cost,
    )(x_p, wih_t, whh_t, bias, w_conv)
    return out[:T, :, :H]


# ---------------------------------------------------------------------------
# Pure-JAX reference (same bf16-operand / f32-accumulation policy) for checking
# ---------------------------------------------------------------------------
def _reference(x, params, *, compute_dtype=jnp.bfloat16):
    T, N, H = x.shape
    cd = compute_dtype
    xb = x.astype(cd)
    wih = params["w_ih"].astype(cd)
    whh = params["w_hh"].astype(cd)
    b = (params["b_ih"] + params["b_hh"]).astype(jnp.float32)
    h = jnp.zeros((N, H), jnp.float32)
    ys = []
    for t in range(T):
        acc = jnp.dot(xb[t], wih.T, preferred_element_type=jnp.float32)
        acc += jnp.dot(h.astype(cd), whh.T, preferred_element_type=jnp.float32)
        h = jnp.tanh(acc + b)
        ys.append(h.astype(cd))
    y = jnp.stack(ys, axis=0)                       # (T, N, H)

    K = params["w_cnn"].shape[-1]
    pad = (K - 1) // 2
    yp = jnp.pad(y, ((0, 0), (pad, pad), (0, 0)))
    wc = params["w_cnn"].astype(cd)
    wg = params["w_gate"].astype(cd)
    a = jnp.zeros((T, N, H), jnp.float32)
    g = jnp.zeros((T, N, H), jnp.float32)
    for j in range(K):
        win = yp[:, j:j + N, :]
        a += jnp.einsum("bsi,oi->bso", win, wc[:, :, j],
                        preferred_element_type=jnp.float32)
        g += jnp.einsum("bsi,oi->bso", win, wg[:, :, j],
                        preferred_element_type=jnp.float32)
    return (a * jax.nn.sigmoid(g)).astype(jnp.float32)


if __name__ == "__main__":
    # Small shapes consistent with the module: (seq=2, batch=8, hidden=32), k=3.
    T, N, H, K = 2, 8, 32, 3
    key = jax.random.PRNGKey(0)
    ks = jax.random.split(key, 7)
    scale = H ** -0.5
    x = jax.random.normal(ks[0], (T, N, H), jnp.float32)
    params = dict(
        w_ih=jax.random.normal(ks[1], (H, H), jnp.float32) * scale,
        w_hh=jax.random.normal(ks[2], (H, H), jnp.float32) * scale,
        b_ih=jax.random.normal(ks[3], (H,), jnp.float32) * scale,
        b_hh=jax.random.normal(ks[4], (H,), jnp.float32) * scale,
        w_cnn=jax.random.normal(ks[5], (H, H, K), jnp.float32) * 0.1,
        w_gate=jax.random.normal(ks[6], (H, H, K), jnp.float32) * 0.1,
    )

    fwd = jax.jit(rcnn_forward)
    out = jax.block_until_ready(fwd(x, params))
    ref = _reference(x, params)

    assert out.shape == (T, N, H)
    assert jnp.allclose(out, ref, atol=1e-2, rtol=1e-2), "mismatch vs reference"
    print("KERNEL_OK")
</pallas_src>

<mosaic_0001>
module attributes {stable_mosaic.version = 11 : i64} {
  func.func @_rcnn_kernel(%arg0: i32, %arg1: memref<2x8x128xbf16, #tpu.memory_space<vmem>>, %arg2: memref<128x128xbf16, #tpu.memory_space<vmem>>, %arg3: memref<128x128xbf16, #tpu.memory_space<vmem>>, %arg4: memref<1x128xf32, #tpu.memory_space<vmem>>, %arg5: memref<3x128x256xbf16, #tpu.memory_space<vmem>>, %arg6: memref<2x8x128xf32, #tpu.memory_space<vmem>>, %arg7: memref<8x128xf32, #tpu.memory_space<vmem>>, %arg8: memref<2x8x128xf32, #tpu.memory_space<vmem>>, %arg9: memref<2x8x128xbf16, #tpu.memory_space<vmem>>) attributes {dimension_semantics = [#tpu.dimension_semantics<arbitrary>], iteration_bounds = array<i64: 1>, scalar_prefetch = 0 : i64, scratch_operands = 3 : i64, tpu.core_type = #tpu.core_type<tc>, window_params = [{transform_indices = @transform_0, window_bounds = array<i64: 2, 8, 128>}, {pipeline_mode = #tpu.pipeline_mode<synchronous>, transform_indices = @transform_1, window_bounds = array<i64: 128, 128>}, {pipeline_mode = #tpu.pipeline_mode<synchronous>, transform_indices = @transform_2, window_bounds = array<i64: 128, 128>}, {pipeline_mode = #tpu.pipeline_mode<synchronous>, transform_indices = @transform_3, window_bounds = array<i64: 1, 128>}, {pipeline_mode = #tpu.pipeline_mode<synchronous>, transform_indices = @transform_4, window_bounds = array<i64: 3, 128, 256>}, {transform_indices = @transform_5, window_bounds = array<i64: 2, 8, 128>}]} {
    %c0_i32 = arith.constant 0 : i32
    %0 = arith.cmpi eq, %arg0, %c0_i32 : i32
    %1 = arith.extui %0 : i1 to i32
    %c0_i32_0 = arith.constant 0 : i32
    %2 = arith.cmpi ne, %1, %c0_i32_0 : i32
    scf.if %2 {
      %cst_52 = arith.constant 0.000000e+00 : f32
      %74 = vector.broadcast %cst_52 : f32 to vector<8x128xf32>
      %c0_53 = arith.constant 0 : index
      %c0_54 = arith.constant 0 : index
      %75 = vector.load %arg7[%c0_53, %c0_54] : memref<8x128xf32, #tpu.memory_space<vmem>>, vector<8x128xf32>
      tpu.vector_store %arg7[%c0_53, %c0_54], %74 {strides = array<i32>} : memref<8x128xf32, #tpu.memory_space<vmem>>, vector<8x128xf32>,
    } else {
    }
    %c0 = arith.constant 0 : index
    %c0_1 = arith.constant 0 : index
    %c0_2 = arith.constant 0 : index
    %3 = vector.load %arg1[%c0, %c0_1, %c0_2] : memref<2x8x128xbf16, #tpu.memory_space<vmem>>, vector<2x8x128xbf16>
    %4 = vector.shape_cast %3 : vector<2x8x128xbf16> to vector<16x128xbf16>
    %c0_3 = arith.constant 0 : index
    %c0_4 = arith.constant 0 : index
    %5 = vector.load %arg2[%c0_3, %c0_4] : memref<128x128xbf16, #tpu.memory_space<vmem>>, vector<128x128xbf16>
    %cst = arith.constant dense<0.000000e+00> : vector<16x128xf32>
    %6 = tpu.matmul %4, %5, %cst {dimension_numbers = #tpu.dot_dimension_numbers<[1], [0], [0], [1], [0, 0, 1, 1], [], []>} : vector<16x128xbf16>, vector<128x128xbf16>, vector<16x128xf32> -> vector<16x128xf32>
    %c0_5 = arith.constant 0 : index
    %c0_6 = arith.constant 0 : index
    %7 = vector.load %arg4[%c0_5, %c0_6] : memref<1x128xf32, #tpu.memory_space<vmem>>, vector<1x128xf32>
    %8 = vector.broadcast %7 : vector<1x128xf32> to vector<16x128xf32>
    %9 = arith.addf %6, %8 : vector<16x128xf32>
    %10 = vector.shape_cast %9 : vector<16x128xf32> to vector<2x8x128xf32>
    %c0_7 = arith.constant 0 : index
    %c0_8 = arith.constant 0 : index
    %c0_9 = arith.constant 0 : index
    %11 = vector.load %arg8[%c0_7, %c0_8, %c0_9] : memref<2x8x128xf32, #tpu.memory_space<vmem>>, vector<2x8x128xf32>
    tpu.vector_store %arg8[%c0_7, %c0_8, %c0_9], %10 {strides = array<i32>} : memref<2x8x128xf32, #tpu.memory_space<vmem>>, vector<2x8x128xf32>,
    %c0_i32_10 = arith.constant 0 : i32
    %12 = arith.index_cast %c0_i32_10 : i32 to index
    %c0_11 = arith.constant 0 : index
    %c0_12 = arith.constant 0 : index
    %13 = vector.load %arg8[%12, %c0_11, %c0_12] : memref<2x8x128xf32, #tpu.memory_space<vmem>>, vector<1x8x128xf32>
    %14 = vector.shape_cast %13 : vector<1x8x128xf32> to vector<8x128xf32>
    %c0_13 = arith.constant 0 : index
    %c0_14 = arith.constant 0 : index
    %15 = vector.load %arg7[%c0_13, %c0_14] : memref<8x128xf32, #tpu.memory_space<vmem>>, vector<8x128xf32>
    %16 = arith.truncf %15 : vector<8x128xf32> to vector<8x128xbf16>
    %c0_15 = arith.constant 0 : index
    %c0_16 = arith.constant 0 : index
    %17 = vector.load %arg3[%c0_15, %c0_16] : memref<128x128xbf16, #tpu.memory_space<vmem>>, vector<128x128xbf16>
    %cst_17 = arith.constant dense<0.000000e+00> : vector<8x128xf32>
    %18 = tpu.matmul %16, %17, %cst_17 {dimension_numbers = #tpu.dot_dimension_numbers<[1], [0], [0], [1], [0, 0, 1, 1], [], []>} : vector<8x128xbf16>, vector<128x128xbf16>, vector<8x128xf32> -> vector<8x128xf32>
    %19 = arith.addf %14, %18 : vector<8x128xf32>
    %20 = math.tanh %19 : vector<8x128xf32>
    %c0_18 = arith.constant 0 : index
    %c0_19 = arith.constant 0 : index
    %21 = vector.load %arg7[%c0_18, %c0_19] : memref<8x128xf32, #tpu.memory_space<vmem>>, vector<8x128xf32>
    tpu.vector_store %arg7[%c0_18, %c0_19], %20 {strides = array<i32>} : memref<8x128xf32, #tpu.memory_space<vmem>>, vector<8x128xf32>,
    %22 = arith.truncf %20 : vector<8x128xf32> to vector<8x128xbf16>
    %23 = arith.index_cast %c0_i32_10 : i32 to index
    %c0_20 = arith.constant 0 : index
    %c0_21 = arith.constant 0 : index
    %24 = vector.load %arg9[%23, %c0_20, %c0_21] : memref<2x8x128xbf16, #tpu.memory_space<vmem>>, vector<1x8x128xbf16>
    %25 = vector.shape_cast %24 : vector<1x8x128xbf16> to vector<8x128xbf16>
    %26 = vector.shape_cast %22 : vector<8x128xbf16> to vector<1x8x128xbf16>
    tpu.vector_store %arg9[%23, %c0_20, %c0_21], %26 {strides = array<i32>} : memref<2x8x128xbf16, #tpu.memory_space<vmem>>, vector<1x8x128xbf16>,
    %c1_i32 = arith.constant 1 : i32
    %27 = arith.index_cast %c1_i32 : i32 to index
    %c0_22 = arith.constant 0 : index
    %c0_23 = arith.constant 0 : index
    %28 = vector.load %arg8[%27, %c0_22, %c0_23] : memref<2x8x128xf32, #tpu.memory_space<vmem>>, vector<1x8x128xf32>
    %29 = vector.shape_cast %28 : vector<1x8x128xf32> to vector<8x128xf32>
    %c0_24 = arith.constant 0 : index
    %c0_25 = arith.constant 0 : index
    %30 = vector.load %arg7[%c0_24, %c0_25] : memref<8x128xf32, #tpu.memory_space<vmem>>, vector<8x128xf32>
    %31 = arith.truncf %30 : vector<8x128xf32> to vector<8x128xbf16>
    %c0_26 = arith.constant 0 : index
    %c0_27 = arith.constant 0 : index
    %32 = vector.load %arg3[%c0_26, %c0_27] : memref<128x128xbf16, #tpu.memory_space<vmem>>, vector<128x128xbf16>
    %cst_28 = arith.constant dense<0.000000e+00> : vector<8x128xf32>
    %33 = tpu.matmul %31, %32, %cst_28 {dimension_numbers = #tpu.dot_dimension_numbers<[1], [0], [0], [1], [0, 0, 1, 1], [], []>} : vector<8x128xbf16>, vector<128x128xbf16>, vector<8x128xf32> -> vector<8x128xf32>
    %34 = arith.addf %29, %33 : vector<8x128xf32>
    %35 = math.tanh %34 : vector<8x128xf32>
    %c0_29 = arith.constant 0 : index
    %c0_30 = arith.constant 0 : index
    %36 = vector.load %arg7[%c0_29, %c0_30] : memref<8x128xf32, #tpu.memory_space<vmem>>, vector<8x128xf32>
    tpu.vector_store %arg7[%c0_29, %c0_30], %35 {strides = array<i32>} : memref<8x128xf32, #tpu.memory_space<vmem>>, vector<8x128xf32>,
    %37 = arith.truncf %35 : vector<8x128xf32> to vector<8x128xbf16>
    %38 = arith.index_cast %c1_i32 : i32 to index
    %c0_31 = arith.constant 0 : index
    %c0_32 = arith.constant 0 : index
    %39 = vector.load %arg9[%38, %c0_31, %c0_32] : memref<2x8x128xbf16, #tpu.memory_space<vmem>>, vector<1x8x128xbf16>
    %40 = vector.shape_cast %39 : vector<1x8x128xbf16> to vector<8x128xbf16>
    %41 = vector.shape_cast %37 : vector<8x128xbf16> to vector<1x8x128xbf16>
    tpu.vector_store %arg9[%38, %c0_31, %c0_32], %41 {strides = array<i32>} : memref<2x8x128xbf16, #tpu.memory_space<vmem>>, vector<1x8x128xbf16>,
    %c2_i32 = arith.constant 2 : i32
    %c0_33 = arith.constant 0 : index
    %c0_34 = arith.constant 0 : index
    %c0_35 = arith.constant 0 : index
    %42 = vector.load %arg9[%c0_33, %c0_34, %c0_35] : memref<2x8x128xbf16, #tpu.memory_space<vmem>>, vector<2x8x128xbf16>
    %cst_36 = arith.constant 0.000000e+00 : bf16
    %43 = vector.broadcast %cst_36 : bf16 to vector<2x1x128xbf16>
    %44 = tpu.concatenate %43, %42, %43 in 1 : vector<2x1x128xbf16>, vector<2x8x128xbf16>, vector<2x1x128xbf16> -> vector<2x10x128xbf16>
    %cst_37 = arith.constant 0.000000e+00 : f32
    %45 = vector.broadcast %cst_37 : f32 to vector<16x256xf32>
    %46 = vector.extract_strided_slice %44 {offsets = [0, 0, 0], sizes = [2, 8, 128], strides = [1, 1, 1]} : vector<2x10x128xbf16> to vector<2x8x128xbf16>
    %47 = vector.shape_cast %46 : vector<2x8x128xbf16> to vector<16x128xbf16>
    %c0_38 = arith.constant 0 : index
    %c0_39 = arith.constant 0 : index
    %c0_40 = arith.constant 0 : index
    %48 = vector.load %arg5[%c0_38, %c0_39, %c0_40] : memref<3x128x256xbf16, #tpu.memory_space<vmem>>, vector<1x128x256xbf16>
    %49 = vector.shape_cast %48 : vector<1x128x256xbf16> to vector<128x256xbf16>
    %cst_41 = arith.constant dense<0.000000e+00> : vector<16x256xf32>
    %50 = tpu.matmul %47, %49, %cst_41 {dimension_numbers = #tpu.dot_dimension_numbers<[1], [0], [0], [1], [0, 0, 1, 1], [], []>} : vector<16x128xbf16>, vector<128x256xbf16>, vector<16x256xf32> -> vector<16x256xf32>
    %51 = arith.addf %45, %50 : vector<16x256xf32>
    %52 = vector.extract_strided_slice %44 {offsets = [0, 1, 0], sizes = [2, 8, 128], strides = [1, 1, 1]} : vector<2x10x128xbf16> to vector<2x8x128xbf16>
    %53 = vector.shape_cast %52 : vector<2x8x128xbf16> to vector<16x128xbf16>
    %c1 = arith.constant 1 : index
    %c0_42 = arith.constant 0 : index
    %c0_43 = arith.constant 0 : index
    %54 = vector.load %arg5[%c1, %c0_42, %c0_43] : memref<3x128x256xbf16, #tpu.memory_space<vmem>>, vector<1x128x256xbf16>
    %55 = vector.shape_cast %54 : vector<1x128x256xbf16> to vector<128x256xbf16>
    %cst_44 = arith.constant dense<0.000000e+00> : vector<16x256xf32>
    %56 = tpu.matmul %53, %55, %cst_44 {dimension_numbers = #tpu.dot_dimension_numbers<[1], [0], [0], [1], [0, 0, 1, 1], [], []>} : vector<16x128xbf16>, vector<128x256xbf16>, vector<16x256xf32> -> vector<16x256xf32>
    %57 = arith.addf %51, %56 : vector<16x256xf32>
    %58 = vector.extract_strided_slice %44 {offsets = [0, 2, 0], sizes = [2, 8, 128], strides = [1, 1, 1]} : vector<2x10x128xbf16> to vector<2x8x128xbf16>
    %59 = vector.shape_cast %58 : vector<2x8x128xbf16> to vector<16x128xbf16>
    %c2 = arith.constant 2 : index
    %c0_45 = arith.constant 0 : index
    %c0_46 = arith.constant 0 : index
    %60 = vector.load %arg5[%c2, %c0_45, %c0_46] : memref<3x128x256xbf16, #tpu.memory_space<vmem>>, vector<1x128x256xbf16>
    %61 = vector.shape_cast %60 : vector<1x128x256xbf16> to vector<128x256xbf16>
    %cst_47 = arith.constant dense<0.000000e+00> : vector<16x256xf32>
    %62 = tpu.matmul %59, %61, %cst_47 {dimension_numbers = #tpu.dot_dimension_numbers<[1], [0], [0], [1], [0, 0, 1, 1], [], []>} : vector<16x128xbf16>, vector<128x256xbf16>, vector<16x256xf32> -> vector<16x256xf32>
    %63 = arith.addf %57, %62 : vector<16x256xf32>
    %64 = vector.extract_strided_slice %63 {offsets = [0, 0], sizes = [16, 128], strides = [1, 1]} : vector<16x256xf32> to vector<16x128xf32>
    %65 = vector.extract_strided_slice %63 {offsets = [0, 128], sizes = [16, 128], strides = [1, 1]} : vector<16x256xf32> to vector<16x128xf32>
    %66 = arith.negf %65 : vector<16x128xf32>
    %67 = math.exp %66 : vector<16x128xf32>
    %cst_48 = arith.constant 1.000000e+00 : f32
    %68 = vector.broadcast %cst_48 : f32 to vector<16x128xf32>
    %69 = arith.addf %68, %67 : vector<16x128xf32>
    %70 = arith.divf %68, %69 : vector<16x128xf32>
    %71 = arith.mulf %64, %70 : vector<16x128xf32>
    %72 = vector.shape_cast %71 : vector<16x128xf32> to vector<2x8x128xf32>
    %c0_49 = arith.constant 0 : index
    %c0_50 = arith.constant 0 : index
    %c0_51 = arith.constant 0 : index
    %73 = vector.load %arg6[%c0_49, %c0_50, %c0_51] : memref<2x8x128xf32, #tpu.memory_space<vmem>>, vector<2x8x128xf32>
    tpu.vector_store %arg6[%c0_49, %c0_50, %c0_51], %72 {strides = array<i32>} : memref<2x8x128xf32, #tpu.memory_space<vmem>>, vector<2x8x128xf32>,
    return
  }
  func.func @transform_0(%arg0: i32) -> (i32, i32, i32) {
    %c0_i32 = arith.constant 0 : i32
    %c0_i32_0 = arith.constant 0 : i32
    %c0_i32_1 = arith.constant 0 : i32
    return %arg0, %c0_i32, %c0_i32_0 : i32, i32, i32
  }
  func.func @transform_1(%arg0: i32) -> (i32, i32) {
    %c0_i32 = arith.constant 0 : i32
    %c0_i32_0 = arith.constant 0 : i32
    %c0_i32_1 = arith.constant 0 : i32
    return %c0_i32, %c0_i32_0 : i32, i32
  }
  func.func @transform_2(%arg0: i32) -> (i32, i32) {
    %c0_i32 = arith.constant 0 : i32
    %c0_i32_0 = arith.constant 0 : i32
    %c0_i32_1 = arith.constant 0 : i32
    return %c0_i32, %c0_i32_0 : i32, i32
  }
  func.func @transform_3(%arg0: i32) -> (i32, i32) {
    %c0_i32 = arith.constant 0 : i32
    %c0_i32_0 = arith.constant 0 : i32
    %c0_i32_1 = arith.constant 0 : i32
    return %c0_i32, %c0_i32_0 : i32, i32
  }
  func.func @transform_4(%arg0: i32) -> (i32, i32, i32) {
    %c0_i32 = arith.constant 0 : i32
    %c0_i32_0 = arith.constant 0 : i32
    %c0_i32_1 = arith.constant 0 : i32
    %c0_i32_2 = arith.constant 0 : i32
    return %c0_i32, %c0_i32_0, %c0_i32_1 : i32, i32, i32
  }
  func.func @transform_5(%arg0: i32) -> (i32, i32, i32) {
    %c0_i32 = arith.constant 0 : i32
    %c0_i32_0 = arith.constant 0 : i32
    %c0_i32_1 = arith.constant 0 : i32
    return %arg0, %c0_i32, %c0_i32_0 : i32, i32, i32
  }
}

</mosaic_0001>

<llo_original>
// kernel: rcnn_forward.1
$region0: #{rcnn_forward.1}
  #allocation0 [shape = 'u32[]', space=smem, size = 0x4, offset = 0x4, fixed_abs, tag = 'smem constant byte address 0x4 - core index']
  #allocation1 [shape = 'u32[72,128]{1,0:T(1,128)}', space=vmem, size = 0x9000, scoped, tag = 'internal scratch']
  #allocation2 [shape = 'f32[8,128]{1,0:T(8,128)}', space=vmem, size = 0x1000, scoped, tag = 'scratch operand']
  #allocation3 [shape = 'f32[2,8,128]{2,1,0:T(8,128)}', space=vmem, size = 0x2000, scoped, tag = 'scratch operand']
  #allocation4 [shape = 'bf16[2,8,128]{2,1,0:T(8,128)(2,1)}', space=vmem, size = 0x1000, scoped, tag = 'scratch operand']
  %s0 = inlined_call_operand.vmem [shape: bf16[2,8,128], index: 0, kind: input, shape index: {}]
  %s1 = inlined_call_operand.vmem [shape: bf16[128,128], index: 1, kind: input, shape index: {}]
  %s2 = inlined_call_operand.vmem [shape: bf16[128,128], index: 2, kind: input, shape index: {}]
  %s3 = inlined_call_operand.vmem [shape: f32[1,128], index: 3, kind: input, shape index: {}]
  %s4 = inlined_call_operand.vmem [shape: bf16[3,128,256], index: 4, kind: input, shape index: {}]
  %s5 = inlined_call_operand.hbm [shape: f32[2,8,128], index: 5, kind: output, shape index: {}]
  %s6 = sld [smem:[#allocation0]]
  $region34: #{rcnn_forward.1} parent=0
    _
  %s8 = ssub.s32 1, %s6
  %s9 = scalar_select 0, %s8, %s6
  $region1: #{rcnn_forward.1} parent=0
    #allocation5 [shape = 'u8[8192]{0}', space=vmem, size = 0x2000, scoped, tag = 'output window, operand 0, single buffered']
    #allocation6 [shape = 's32[1]{0}', space=sflag, size = 0x4, scoped, tag = 'scoped memory for rcnn_forward.1']
    %10 = vsyncpa [#allocation6], 0
    // Predicated region
    $region2: #{rcnn_forward.1} parent=1 // pred_check
      _
    $region3: #{rcnn_forward.1} parent=1 // pred_check_branch
      %12 = sbr.rel (0) target = $region5
    $region4: #{rcnn_forward.1} parent=1 // pred_region
      _
    $region5: #{rcnn_forward.1} parent=1 // pred_fallthru
      _
    // Predicated region
    $region6: #{rcnn_forward.1} parent=1 // pred_check
      _
    $region7: #{rcnn_forward.1} parent=1 // pred_check_branch
      %14 = sbr.rel (0) target = $region9
    $region8: #{rcnn_forward.1} parent=1 // pred_region
      _
    $region9: #{rcnn_forward.1} parent=1 // pred_fallthru
      _
    // Predicated region
    $region10: #{rcnn_forward.1} parent=1 // pred_check
      _
    $region11: #{rcnn_forward.1} parent=1 // pred_check_branch
      %16 = sbr.rel (0) target = $region13
    $region12: #{rcnn_forward.1} parent=1 // pred_region
      _
    $region13: #{rcnn_forward.1} parent=1 // pred_fallthru
      _
    // Predicated region
    $region14: #{rcnn_forward.1} parent=1 // pred_check
      _
    $region15: #{rcnn_forward.1} parent=1 // pred_check_branch
      %18 = sbr.rel (0) target = $region17
    $region16: #{rcnn_forward.1} parent=1 // pred_region
      _
    $region17: #{rcnn_forward.1} parent=1 // pred_fallthru
      _
    // Predicated region
    $region18: #{rcnn_forward.1} parent=1 // pred_check
      _
    $region19: #{rcnn_forward.1} parent=1 // pred_check_branch
      %20 = sbr.rel (0) target = $region21
    $region20: #{rcnn_forward.1} parent=1 // pred_region
      _
    $region21: #{rcnn_forward.1} parent=1 // pred_fallthru
      _
    %p22 = scmp.eq.s32.totalorder 0, 0
    // Predicated region
    $region22: #{rcnn_forward.1} parent=1 // pred_check
      %p23 = pneg %p22
    $region23: #{rcnn_forward.1} parent=1 // pred_check_branch
      %25 = sbr.rel (%p23) target = $region25
    $region24: #{rcnn_forward.1} parent=1 // pred_region
      %26 = vst [vmem:[#allocation2] sm:$0xff] 0.0
    $region25: #{rcnn_forward.1} parent=1 // pred_fallthru
      _
    %v27 = vld [vmem:[%s0] sm:$0xf]
    %v28 = vld [vmem:[%s0 + $0x4] sm:$0xf]
    %v29 = vld [vmem:[%s1] sm:$0xf]
    %v30 = vld [vmem:[%s1 + $0x4] sm:$0xf]
    %v31 = vld [vmem:[%s1 + $0x8] sm:$0xf]
    %v32 = vld [vmem:[%s1 + $0xc] sm:$0xf]
    %v33 = vld [vmem:[%s1 + $0x10] sm:$0xf]
    %v34 = vld [vmem:[%s1 + $0x14] sm:$0xf]
    %v35 = vld [vmem:[%s1 + $0x18] sm:$0xf]
    %v36 = vld [vmem:[%s1 + $0x1c] sm:$0xf]
    %v37 = vld [vmem:[%s1 + $0x20] sm:$0xf]
    %v38 = vld [vmem:[%s1 + $0x24] sm:$0xf]
    %v39 = vld [vmem:[%s1 + $0x28] sm:$0xf]
    %v40 = vld [vmem:[%s1 + $0x2c] sm:$0xf]
    %v41 = vld [vmem:[%s1 + $0x30] sm:$0xf]
    %v42 = vld [vmem:[%s1 + $0x34] sm:$0xf]
    %v43 = vld [vmem:[%s1 + $0x38] sm:$0xf]
    %v44 = vld [vmem:[%s1 + $0x3c] sm:$0xf]
    %v45 = vld [vmem:[%s3] sm:$0x1]
    %v47 = vperm.slane %v45, 0
    %v51 = vunpack.c.l.b16 %v27
    %v52 = vunpack.c.l.b16 %v28
    %v53 = vpack.c.b16 %v52, %v51
    %v71 = vunpack.c.l.b16 %v29
    %v72 = vunpack.c.l.b16 %v30
    %v73 = vunpack.c.l.b16 %v31
    %v74 = vunpack.c.l.b16 %v32
    %v75 = vunpack.c.l.b16 %v33
    %v76 = vunpack.c.l.b16 %v34
    %v77 = vunpack.c.l.b16 %v35
    %v78 = vunpack.c.l.b16 %v36
    %v79 = vunpack.c.l.b16 %v37
    %v80 = vunpack.c.l.b16 %v38
    %v81 = vunpack.c.l.b16 %v39
    %v82 = vunpack.c.l.b16 %v40
    %v83 = vunpack.c.l.b16 %v41
    %v84 = vunpack.c.l.b16 %v42
    %v85 = vunpack.c.l.b16 %v43
    %v86 = vunpack.c.l.b16 %v44
    %v87 = vpack.c.b16 %v72, %v71
    %v88 = vpack.c.b16 %v74, %v73
    %v89 = vpack.c.b16 %v76, %v75
    %v90 = vpack.c.b16 %v78, %v77
    %v91 = vpack.c.b16 %v80, %v79
    %v92 = vpack.c.b16 %v82, %v81
    %v93 = vpack.c.b16 %v84, %v83
    %v94 = vpack.c.b16 %v86, %v85
    %103 = vmatpush.bf16.msra.mxu0 %v94
    %104 = vmatpush.bf16.msra.mxu0 %v93
    %105 = vmatpush.bf16.msra.mxu0 %v92
    %106 = vmatpush.bf16.msra.mxu0 %v91
    %107 = vmatpush.bf16.msra.mxu0 %v90
    %108 = vmatpush.bf16.msra.mxu0 %v89
    %109 = vmatpush.bf16.msra.mxu0 %v88
    %110 = vmatpush.bf16.msra.mxu0 %v87
    %111 = vmatmul.bf16.gmra.mxu0 %v53
    %v112 = vpop.f32.mrf.mxu0
    %v113 = vadd.f32 %v47, %v112
    %v114 = vpop.f32.mrf.mxu0
    %v115 = vadd.f32 %v47, %v114
    %116 = vdwg.mxu0
    %117 = vst [vmem:[#allocation3] sm:$0xff] %v113
    %118 = vst [vmem:[#allocation3 + $0x8] sm:$0xff] %v115
    %v119 = vld [vmem:[#allocation3] sm:$0xff]
    %v120 = vld [vmem:[#allocation2] sm:$0xff]
    %v121 = vpack.c.bf16 %v120, %v120
    %v122 = vld [vmem:[%s2] sm:$0xf]
    %v123 = vld [vmem:[%s2 + $0x4] sm:$0xf]
    %v124 = vld [vmem:[%s2 + $0x8] sm:$0xf]
    %v125 = vld [vmem:[%s2 + $0xc] sm:$0xf]
    %v126 = vld [vmem:[%s2 + $0x10] sm:$0xf]
    %v127 = vld [vmem:[%s2 + $0x14] sm:$0xf]
    %v128 = vld [vmem:[%s2 + $0x18] sm:$0xf]
    %v129 = vld [vmem:[%s2 + $0x1c] sm:$0xf]
    %v130 = vld [vmem:[%s2 + $0x20] sm:$0xf]
    %v131 = vld [vmem:[%s2 + $0x24] sm:$0xf]
    %v132 = vld [vmem:[%s2 + $0x28] sm:$0xf]
    %v133 = vld [vmem:[%s2 + $0x2c] sm:$0xf]
    %v134 = vld [vmem:[%s2 + $0x30] sm:$0xf]
    %v135 = vld [vmem:[%s2 + $0x34] sm:$0xf]
    %v136 = vld [vmem:[%s2 + $0x38] sm:$0xf]
    %v137 = vld [vmem:[%s2 + $0x3c] sm:$0xf]
    %v154 = vunpack.c.l.b16 %v122
    %v155 = vunpack.c.l.b16 %v123
    %v156 = vunpack.c.l.b16 %v124
    %v157 = vunpack.c.l.b16 %v125
    %v158 = vunpack.c.l.b16 %v126
    %v159 = vunpack.c.l.b16 %v127
    %v160 = vunpack.c.l.b16 %v128
    %v161 = vunpack.c.l.b16 %v129
    %v162 = vunpack.c.l.b16 %v130
    %v163 = vunpack.c.l.b16 %v131
    %v164 = vunpack.c.l.b16 %v132
    %v165 = vunpack.c.l.b16 %v133
    %v166 = vunpack.c.l.b16 %v134
    %v167 = vunpack.c.l.b16 %v135
    %v168 = vunpack.c.l.b16 %v136
    %v169 = vunpack.c.l.b16 %v137
    %v170 = vpack.c.b16 %v155, %v154
    %v171 = vpack.c.b16 %v157, %v156
    %v172 = vpack.c.b16 %v159, %v158
    %v173 = vpack.c.b16 %v161, %v160
    %v174 = vpack.c.b16 %v163, %v162
    %v175 = vpack.c.b16 %v165, %v164
    %v176 = vpack.c.b16 %v167, %v166
    %v177 = vpack.c.b16 %v169, %v168
    %186 = vmatpush.bf16.msra.mxu0 %v177
    %187 = vmatpush.bf16.msra.mxu0 %v176
    %188 = vmatpush.bf16.msra.mxu0 %v175
    %189 = vmatpush.bf16.msra.mxu0 %v174
    %190 = vmatpush.bf16.msra.mxu0 %v173
    %191 = vmatpush.bf16.msra.mxu0 %v172
    %192 = vmatpush.bf16.msra.mxu0 %v171
    %193 = vmatpush.bf16.msra.mxu0 %v170
    %194 = vmatmul.bf16.gmra.mxu0 %v121
    %v195 = vpop.f32.mrf.mxu0
    %v196 = vadd.f32 0.0, %v195
    %v197 = vpop.f32.mrf.mxu0
    %198 = vdwg.mxu0
    %v199 = vadd.f32 %v119, %v196
    %v200 = vtanh.pop %v199
    %201 = vst [vmem:[#allocation2] sm:$0xff] %v200
    %v202 = vpack.c.bf16 %v200, %v200
    %203 = vst [vmem:[#allocation4] sm:$0xf] %v202
    %s204 = scalar_lea.vmem [#allocation3], 8
    %v205 = vld [vmem:[%s204] sm:$0xff]
    %v206 = vld [vmem:[#allocation2] sm:$0xff]
    %v207 = vpack.c.bf16 %v206, %v206
    %v208 = vld [vmem:[%s2] sm:$0xf]
    %v209 = vld [vmem:[%s2 + $0x4] sm:$0xf]
    %v210 = vld [vmem:[%s2 + $0x8] sm:$0xf]
    %v211 = vld [vmem:[%s2 + $0xc] sm:$0xf]
    %v212 = vld [vmem:[%s2 + $0x10] sm:$0xf]
    %v213 = vld [vmem:[%s2 + $0x14] sm:$0xf]
    %v214 = vld [vmem:[%s2 + $0x18] sm:$0xf]
    %v215 = vld [vmem:[%s2 + $0x1c] sm:$0xf]
    %v216 = vld [vmem:[%s2 + $0x20] sm:$0xf]
    %v217 = vld [vmem:[%s2 + $0x24] sm:$0xf]
    %v218 = vld [vmem:[%s2 + $0x28] sm:$0xf]
    %v219 = vld [vmem:[%s2 + $0x2c] sm:$0xf]
    %v220 = vld [vmem:[%s2 + $0x30] sm:$0xf]
    %v221 = vld [vmem:[%s2 + $0x34] sm:$0xf]
    %v222 = vld [vmem:[%s2 + $0x38] sm:$0xf]
    %v223 = vld [vmem:[%s2 + $0x3c] sm:$0xf]
    %v240 = vunpack.c.l.b16 %v208
    %v241 = vunpack.c.l.b16 %v209
    %v242 = vunpack.c.l.b16 %v210
    %v243 = vunpack.c.l.b16 %v211
    %v244 = vunpack.c.l.b16 %v212
    %v245 = vunpack.c.l.b16 %v213
    %v246 = vunpack.c.l.b16 %v214
    %v247 = vunpack.c.l.b16 %v215
    %v248 = vunpack.c.l.b16 %v216
    %v249 = vunpack.c.l.b16 %v217
    %v250 = vunpack.c.l.b16 %v218
    %v251 = vunpack.c.l.b16 %v219
    %v252 = vunpack.c.l.b16 %v220
    %v253 = vunpack.c.l.b16 %v221
    %v254 = vunpack.c.l.b16 %v222
    %v255 = vunpack.c.l.b16 %v223
    %v256 = vpack.c.b16 %v241, %v240
    %v257 = vpack.c.b16 %v243, %v242
    %v258 = vpack.c.b16 %v245, %v244
    %v259 = vpack.c.b16 %v247, %v246
    %v260 = vpack.c.b16 %v249, %v248
    %v261 = vpack.c.b16 %v251, %v250
    %v262 = vpack.c.b16 %v253, %v252
    %v263 = vpack.c.b16 %v255, %v254
    %272 = vmatpush.bf16.msra.mxu0 %v263
    %273 = vmatpush.bf16.msra.mxu0 %v262
    %274 = vmatpush.bf16.msra.mxu0 %v261
    %275 = vmatpush.bf16.msra.mxu0 %v260
    %276 = vmatpush.bf16.msra.mxu0 %v259
    %277 = vmatpush.bf16.msra.mxu0 %v258
    %278 = vmatpush.bf16.msra.mxu0 %v257
    %279 = vmatpush.bf16.msra.mxu0 %v256
    %280 = vmatmul.bf16.gmra.mxu0 %v207
    %v281 = vpop.f32.mrf.mxu0
    %v282 = vadd.f32 0.0, %v281
    %v283 = vpop.f32.mrf.mxu0
    %284 = vdwg.mxu0
    %v285 = vadd.f32 %v205, %v282
    %v286 = vtanh.pop %v285
    %287 = vst [vmem:[#allocation2] sm:$0xff] %v286
    %v288 = vpack.c.bf16 %v286, %v286
    %s289 = scalar_lea.vmem [#allocation4], 4
    %290 = vst [vmem:[%s289] sm:$0xf] %v288
    %v291 = vld [vmem:[#allocation4] sm:$0xf]
    %v292 = vld [vmem:[#allocation4 + $0x4] sm:$0xf]
    %v295 = vunpack.c.l.b16 %v291
    %v296 = vunpack.c.l.b16 %v292
    %v297 = vpack.c.b16 %v295, %v295
    %v298 = vpack.c.b16 %v296, %v296
    %v300 = vshrl.u32 %v297, 16
    %v302 = vrot.slane %v300, 7
    %v303 = vshll.u32 %v297, 16
    %v305 = vor.u32 %v302, %v303
    %v307 = vshrl.u32 %v298, 16
    %v309 = vrot.slane %v307, 7
    %v310 = vshll.u32 %v298, 16
    %v312 = vor.u32 %v309, %v310
    %vm315 = vcmask 1040384
    %vm316 = vsmask.f32 256
    %vm317 = vmand %vm315, %vm316
    %v318 = vsel %vm317, 0, %v305
    %v319 = vsel %vm317, 0, %v312
    %vm320 = vcmask 1044480
    %vm321 = vsmask.f32 4352
    %vm322 = vmand %vm320, %vm321
    %v323 = vsel %vm322, %v318, 0
    %v324 = vsel %vm322, %v319, 0
    %v325 = vld [vmem:[%s4] sm:$0xff]
    %v326 = vld [vmem:[%s4 + $0x8] sm:$0xff]
    %v327 = vld [vmem:[%s4 + $0x10] sm:$0xff]
    %v328 = vld [vmem:[%s4 + $0x18] sm:$0xff]
    %v329 = vld [vmem:[%s4 + $0x20] sm:$0xff]
    %v330 = vld [vmem:[%s4 + $0x28] sm:$0xff]
    %v331 = vld [vmem:[%s4 + $0x30] sm:$0xff]
    %v332 = vld [vmem:[%s4 + $0x38] sm:$0xff]
    %v333 = vld [vmem:[%s4 + $0x40] sm:$0xff]
    %v334 = vld [vmem:[%s4 + $0x48] sm:$0xff]
    %v335 = vld [vmem:[%s4 + $0x50] sm:$0xff]
    %v336 = vld [vmem:[%s4 + $0x58] sm:$0xff]
    %v337 = vld [vmem:[%s4 + $0x60] sm:$0xff]
    %v338 = vld [vmem:[%s4 + $0x68] sm:$0xff]
    %v339 = vld [vmem:[%s4 + $0x70] sm:$0xff]
    %v340 = vld [vmem:[%s4 + $0x78] sm:$0xff]
    %v343 = vunpack.c.l.b16 %v323
    %v344 = vunpack.c.h.b16 %v323
    %v345 = vunpack.c.l.b16 %v324
    %v346 = vunpack.c.h.b16 %v324
    %v347 = vpack.c.b16 %v343, %v343
    %v348 = vpack.c.b16 %v344, %v344
    %v349 = vpack.c.b16 %v345, %v345
    %v350 = vpack.c.b16 %v346, %v346
    %vm351 = vsmask.f32 3328
    %vm352 = vsmask.f32 7440
    %vm353 = vmor %vm351, %vm352
    %v355 = vshrl.u32 %v347, 16
    %v357 = vrot.slane %v355, 4
    %v358 = vshll.u32 %v347, 16
    %v360 = vrot.slane %v358, 5
    %v361 = vor.u32 %v357, %v360
    %v362 = vrot.slane %v361, 4
    %v364 = vshll.u32 %v348, 16
    %v366 = vrot.slane %v364, 5
    %v367 = vsel %vm353, %v362, %v366
    %v369 = vshrl.u32 %v349, 16
    %v371 = vrot.slane %v369, 4
    %v372 = vshll.u32 %v349, 16
    %v374 = vrot.slane %v372, 5
    %v375 = vor.u32 %v371, %v374
    %v376 = vrot.slane %v375, 4
    %v378 = vshll.u32 %v350, 16
    %v380 = vrot.slane %v378, 5
    %v381 = vsel %vm353, %v376, %v380
    %s382 = scalar_lea.vmem %s4, 128
    %v383 = vld [vmem:[%s382] sm:$0xff]
    %v384 = vld [vmem:[%s382 + $0x8] sm:$0xff]
    %v385 = vld [vmem:[%s382 + $0x10] sm:$0xff]
    %v386 = vld [vmem:[%s382 + $0x18] sm:$0xff]
    %v387 = vld [vmem:[%s382 + $0x20] sm:$0xff]
    %v388 = vld [vmem:[%s382 + $0x28] sm:$0xff]
    %v389 = vld [vmem:[%s382 + $0x30] sm:$0xff]
    %v390 = vld [vmem:[%s382 + $0x38] sm:$0xff]
    %v391 = vld [vmem:[%s382 + $0x40] sm:$0xff]
    %v392 = vld [vmem:[%s382 + $0x48] sm:$0xff]
    %v393 = vld [vmem:[%s382 + $0x50] sm:$0xff]
    %v394 = vld [vmem:[%s382 + $0x58] sm:$0xff]
    %v395 = vld [vmem:[%s382 + $0x60] sm:$0xff]
    %v396 = vld [vmem:[%s382 + $0x68] sm:$0xff]
    %v397 = vld [vmem:[%s382 + $0x70] sm:$0xff]
    %v398 = vld [vmem:[%s382 + $0x78] sm:$0xff]
    %v399 = vunpack.c.l.b16 %v367
    %v400 = vunpack.c.l.b16 %v381
    %v401 = vpack.c.b16 %v400, %v399
    %v419 = vunpack.c.l.b16 %v383
    %v420 = vunpack.c.h.b16 %v383
    %v421 = vunpack.c.l.b16 %v384
    %v422 = vunpack.c.h.b16 %v384
    %v423 = vunpack.c.l.b16 %v385
    %v424 = vunpack.c.h.b16 %v385
    %v425 = vunpack.c.l.b16 %v386
    %v426 = vunpack.c.h.b16 %v386
    %v427 = vunpack.c.l.b16 %v387
    %v428 = vunpack.c.h.b16 %v387
    %v429 = vunpack.c.l.b16 %v388
    %v430 = vunpack.c.h.b16 %v388
    %v431 = vunpack.c.l.b16 %v389
    %v432 = vunpack.c.h.b16 %v389
    %v433 = vunpack.c.l.b16 %v390
    %v434 = vunpack.c.h.b16 %v390
    %v435 = vunpack.c.l.b16 %v391
    %v436 = vunpack.c.h.b16 %v391
    %v437 = vunpack.c.l.b16 %v392
    %v438 = vunpack.c.h.b16 %v392
    %v439 = vunpack.c.l.b16 %v393
    %v440 = vunpack.c.h.b16 %v393
    %v441 = vunpack.c.l.b16 %v394
    %v442 = vunpack.c.h.b16 %v394
    %v443 = vunpack.c.l.b16 %v395
    %v444 = vunpack.c.h.b16 %v395
    %v445 = vunpack.c.l.b16 %v396
    %v446 = vunpack.c.h.b16 %v396
    %v447 = vunpack.c.l.b16 %v397
    %v448 = vunpack.c.h.b16 %v397
    %v449 = vunpack.c.l.b16 %v398
    %v450 = vunpack.c.h.b16 %v398
    %v451 = vpack.c.b16 %v421, %v419
    %v452 = vpack.c.b16 %v422, %v420
    %v453 = vpack.c.b16 %v425, %v423
    %v454 = vpack.c.b16 %v426, %v424
    %v455 = vpack.c.b16 %v429, %v427
    %v456 = vpack.c.b16 %v430, %v428
    %v457 = vpack.c.b16 %v433, %v431
    %v458 = vpack.c.b16 %v434, %v432
    %v459 = vpack.c.b16 %v437, %v435
    %v460 = vpack.c.b16 %v438, %v436
    %v461 = vpack.c.b16 %v441, %v439
    %v462 = vpack.c.b16 %v442, %v440
    %v463 = vpack.c.b16 %v445, %v443
    %v464 = vpack.c.b16 %v446, %v444
    %v465 = vpack.c.b16 %v449, %v447
    %v466 = vpack.c.b16 %v450, %v448
    %483 = vmatpush.bf16.msra.mxu0 %v465
    %484 = vmatpush.bf16.msra.mxu0 %v463
    %485 = vmatpush.bf16.msra.mxu0 %v461
    %486 = vmatpush.bf16.msra.mxu0 %v459
    %487 = vmatpush.bf16.msra.mxu0 %v457
    %488 = vmatpush.bf16.msra.mxu0 %v455
    %489 = vmatpush.bf16.msra.mxu0 %v453
    %490 = vmatpush.bf16.msra.mxu0 %v451
    %491 = vmatmul.bf16.gmra.mxu0 %v401
    %v492 = vpop.f32.mrf.mxu0
    %v493 = vadd.f32 0.0, %v492
    %v494 = vpop.f32.mrf.mxu0
    %v495 = vadd.f32 0.0, %v494
    %496 = vdwg.mxu0
    %497 = vmatpush.bf16.msra.mxu0 %v466
    %498 = vmatpush.bf16.msra.mxu0 %v464
    %499 = vmatpush.bf16.msra.mxu0 %v462
    %500 = vmatpush.bf16.msra.mxu0 %v460
    %501 = vmatpush.bf16.msra.mxu0 %v458
    %502 = vmatpush.bf16.msra.mxu0 %v456
    %503 = vmatpush.bf16.msra.mxu0 %v454
    %504 = vmatpush.bf16.msra.mxu0 %v452
    %505 = vmatmul.bf16.gmra.mxu0 %v401
    %v506 = vpop.f32.mrf.mxu0
    %v507 = vadd.f32 0.0, %v506
    %v508 = vpop.f32.mrf.mxu0
    %v509 = vadd.f32 0.0, %v508
    %510 = vdwg.mxu0
    %v511 = vpack.c.b16 %v345, %v343
    %v529 = vunpack.c.l.b16 %v325
    %v530 = vunpack.c.h.b16 %v325
    %v531 = vunpack.c.l.b16 %v326
    %v532 = vunpack.c.h.b16 %v326
    %v533 = vunpack.c.l.b16 %v327
    %v534 = vunpack.c.h.b16 %v327
    %v535 = vunpack.c.l.b16 %v328
    %v536 = vunpack.c.h.b16 %v328
    %v537 = vunpack.c.l.b16 %v329
    %v538 = vunpack.c.h.b16 %v329
    %v539 = vunpack.c.l.b16 %v330
    %v540 = vunpack.c.h.b16 %v330
    %v541 = vunpack.c.l.b16 %v331
    %v542 = vunpack.c.h.b16 %v331
    %v543 = vunpack.c.l.b16 %v332
    %v544 = vunpack.c.h.b16 %v332
    %v545 = vunpack.c.l.b16 %v333
    %v546 = vunpack.c.h.b16 %v333
    %v547 = vunpack.c.l.b16 %v334
    %v548 = vunpack.c.h.b16 %v334
    %v549 = vunpack.c.l.b16 %v335
    %v550 = vunpack.c.h.b16 %v335
    %v551 = vunpack.c.l.b16 %v336
    %v552 = vunpack.c.h.b16 %v336
    %v553 = vunpack.c.l.b16 %v337
    %v554 = vunpack.c.h.b16 %v337
    %v555 = vunpack.c.l.b16 %v338
    %v556 = vunpack.c.h.b16 %v338
    %v557 = vunpack.c.l.b16 %v339
    %v558 = vunpack.c.h.b16 %v339
    %v559 = vunpack.c.l.b16 %v340
    %v560 = vunpack.c.h.b16 %v340
    %v561 = vpack.c.b16 %v531, %v529
    %v562 = vpack.c.b16 %v532, %v530
    %v563 = vpack.c.b16 %v535, %v533
    %v564 = vpack.c.b16 %v536, %v534
    %v565 = vpack.c.b16 %v539, %v537
    %v566 = vpack.c.b16 %v540, %v538
    %v567 = vpack.c.b16 %v543, %v541
    %v568 = vpack.c.b16 %v544, %v542
    %v569 = vpack.c.b16 %v547, %v545
    %v570 = vpack.c.b16 %v548, %v546
    %v571 = vpack.c.b16 %v551, %v549
    %v572 = vpack.c.b16 %v552, %v550
    %v573 = vpack.c.b16 %v555, %v553
    %v574 = vpack.c.b16 %v556, %v554
    %v575 = vpack.c.b16 %v559, %v557
    %v576 = vpack.c.b16 %v560, %v558
    %593 = vmatpush.bf16.msra.mxu0 %v575
    %594 = vmatpush.bf16.msra.mxu0 %v573
    %595 = vmatpush.bf16.msra.mxu0 %v571
    %596 = vmatpush.bf16.msra.mxu0 %v569
    %597 = vmatpush.bf16.msra.mxu0 %v567
    %598 = vmatpush.bf16.msra.mxu0 %v565
    %599 = vmatpush.bf16.msra.mxu0 %v563
    %600 = vmatpush.bf16.msra.mxu0 %v561
    %601 = vmatmul.bf16.gmra.mxu0 %v511
    %v602 = vpop.f32.mrf.mxu0
    %v603 = vadd.f32 %v493, %v602
    %v604 = vpop.f32.mrf.mxu0
    %v605 = vadd.f32 %v495, %v604
    %606 = vdwg.mxu0
    %607 = vmatpush.bf16.msra.mxu0 %v576
    %608 = vmatpush.bf16.msra.mxu0 %v574
    %609 = vmatpush.bf16.msra.mxu0 %v572
    %610 = vmatpush.bf16.msra.mxu0 %v570
    %611 = vmatpush.bf16.msra.mxu0 %v568
    %612 = vmatpush.bf16.msra.mxu0 %v566
    %613 = vmatpush.bf16.msra.mxu0 %v564
    %614 = vmatpush.bf16.msra.mxu0 %v562
    %615 = vmatmul.bf16.gmra.mxu0 %v511
    %v616 = vpop.f32.mrf.mxu0
    %v617 = vadd.f32 %v507, %v616
    %v618 = vpop.f32.mrf.mxu0
    %v619 = vadd.f32 %v509, %v618
    %620 = vdwg.mxu0
    %vm621 = vcmask 1042432
    %vm622 = vcmask 1046532
    %vm623 = vmor %vm621, %vm622
    %v624 = vrot.slane %v347, 5
    %v625 = vrot.slane %v624, 4
    %v626 = vrot.slane %v348, 5
    %v627 = vsel %vm623, %v625, %v626
    %v628 = vrot.slane %v349, 5
    %v629 = vrot.slane %v628, 4
    %v630 = vrot.slane %v350, 5
    %v631 = vsel %vm623, %v629, %v630
    %s632 = scalar_lea.vmem %s4, 256
    %v633 = vld [vmem:[%s632] sm:$0xff]
    %v634 = vld [vmem:[%s632 + $0x8] sm:$0xff]
    %v635 = vld [vmem:[%s632 + $0x10] sm:$0xff]
    %v636 = vld [vmem:[%s632 + $0x18] sm:$0xff]
    %v637 = vld [vmem:[%s632 + $0x20] sm:$0xff]
    %v638 = vld [vmem:[%s632 + $0x28] sm:$0xff]
    %v639 = vld [vmem:[%s632 + $0x30] sm:$0xff]
    %v640 = vld [vmem:[%s632 + $0x38] sm:$0xff]
    %v641 = vld [vmem:[%s632 + $0x40] sm:$0xff]
    %v642 = vld [vmem:[%s632 + $0x48] sm:$0xff]
    %v643 = vld [vmem:[%s632 + $0x50] sm:$0xff]
    %v644 = vld [vmem:[%s632 + $0x58] sm:$0xff]
    %v645 = vld [vmem:[%s632 + $0x60] sm:$0xff]
    %v646 = vld [vmem:[%s632 + $0x68] sm:$0xff]
    %v647 = vld [vmem:[%s632 + $0x70] sm:$0xff]
    %v648 = vld [vmem:[%s632 + $0x78] sm:$0xff]
    %v649 = vunpack.c.l.b16 %v627
    %v650 = vunpack.c.l.b16 %v631
    %v651 = vpack.c.b16 %v650, %v649
    %v669 = vunpack.c.l.b16 %v633
    %v670 = vunpack.c.h.b16 %v633
    %v671 = vunpack.c.l.b16 %v634
    %v672 = vunpack.c.h.b16 %v634
    %v673 = vunpack.c.l.b16 %v635
    %v674 = vunpack.c.h.b16 %v635
    %v675 = vunpack.c.l.b16 %v636
    %v676 = vunpack.c.h.b16 %v636
    %v677 = vunpack.c.l.b16 %v637
    %v678 = vunpack.c.h.b16 %v637
    %v679 = vunpack.c.l.b16 %v638
    %v680 = vunpack.c.h.b16 %v638
    %v681 = vunpack.c.l.b16 %v639
    %v682 = vunpack.c.h.b16 %v639
    %v683 = vunpack.c.l.b16 %v640
    %v684 = vunpack.c.h.b16 %v640
    %v685 = vunpack.c.l.b16 %v641
    %v686 = vunpack.c.h.b16 %v641
    %v687 = vunpack.c.l.b16 %v642
    %v688 = vunpack.c.h.b16 %v642
    %v689 = vunpack.c.l.b16 %v643
    %v690 = vunpack.c.h.b16 %v643
    %v691 = vunpack.c.l.b16 %v644
    %v692 = vunpack.c.h.b16 %v644
    %v693 = vunpack.c.l.b16 %v645
    %v694 = vunpack.c.h.b16 %v645
    %v695 = vunpack.c.l.b16 %v646
    %v696 = vunpack.c.h.b16 %v646
    %v697 = vunpack.c.l.b16 %v647
    %v698 = vunpack.c.h.b16 %v647
    %v699 = vunpack.c.l.b16 %v648
    %v700 = vunpack.c.h.b16 %v648
    %v701 = vpack.c.b16 %v671, %v669
    %v702 = vpack.c.b16 %v672, %v670
    %v703 = vpack.c.b16 %v675, %v673
    %v704 = vpack.c.b16 %v676, %v674
    %v705 = vpack.c.b16 %v679, %v677
    %v706 = vpack.c.b16 %v680, %v678
    %v707 = vpack.c.b16 %v683, %v681
    %v708 = vpack.c.b16 %v684, %v682
    %v709 = vpack.c.b16 %v687, %v685
    %v710 = vpack.c.b16 %v688, %v686
    %v711 = vpack.c.b16 %v691, %v689
    %v712 = vpack.c.b16 %v692, %v690
    %v713 = vpack.c.b16 %v695, %v693
    %v714 = vpack.c.b16 %v696, %v694
    %v715 = vpack.c.b16 %v699, %v697
    %v716 = vpack.c.b16 %v700, %v698
    %733 = vmatpush.bf16.msra.mxu0 %v715
    %734 = vmatpush.bf16.msra.mxu0 %v713
    %735 = vmatpush.bf16.msra.mxu0 %v711
    %736 = vmatpush.bf16.msra.mxu0 %v709
    %737 = vmatpush.bf16.msra.mxu0 %v707
    %738 = vmatpush.bf16.msra.mxu0 %v705
    %739 = vmatpush.bf16.msra.mxu0 %v703
    %740 = vmatpush.bf16.msra.mxu0 %v701
    %741 = vmatmul.bf16.gmra.mxu0 %v651
    %v742 = vpop.f32.mrf.mxu0
    %v743 = vadd.f32 0.0, %v742
    %v744 = vpop.f32.mrf.mxu0
    %v745 = vadd.f32 0.0, %v744
    %746 = vdwg.mxu0
    %747 = vmatpush.bf16.msra.mxu0 %v716
    %748 = vmatpush.bf16.msra.mxu0 %v714
    %749 = vmatpush.bf16.msra.mxu0 %v712
    %750 = vmatpush.bf16.msra.mxu0 %v710
    %751 = vmatpush.bf16.msra.mxu0 %v708
    %752 = vmatpush.bf16.msra.mxu0 %v706
    %753 = vmatpush.bf16.msra.mxu0 %v704
    %754 = vmatpush.bf16.msra.mxu0 %v702
    %755 = vmatmul.bf16.gmra.mxu0 %v651
    %v756 = vpop.f32.mrf.mxu0
    %v757 = vadd.f32 0.0, %v756
    %v758 = vpop.f32.mrf.mxu0
    %v759 = vadd.f32 0.0, %v758
    %760 = vdwg.mxu0
    %v761 = vadd.f32 %v603, %v743
    %v762 = vadd.f32 %v617, %v757
    %v763 = vadd.f32 %v605, %v745
    %v764 = vadd.f32 %v619, %v759
    %v765 = vxor.u32 %v762, 2147483648
    %v766 = vxor.u32 %v764, 2147483648
    %v767 = vmul.f32 %v765, 1.442695
    %v768 = vpow.pop %v767
    %v769 = vmul.f32 %v766, 1.442695
    %v770 = vpow.pop %v769
    %v771 = vadd.f32 %v768, 1.0
    %v772 = vadd.f32 %v770, 1.0
    %v773 = vrcp.pop %v771
    %v774 = vmul.f32 %v771, %v773
    %v775 = vsub.f32 1.0, %v774
    %v776 = vmul.f32 %v773, %v775
    %v777 = vadd.f32 %v773, %v776
    %vm778 = vweird.f32 %v771
    %vm779 = vweird.f32 %v773
    %vm780 = vmor %vm778, %vm779
    %v781 = vsel %vm780, %v773, %v777
    %v782 = vand.u32 2147483647, %v771
    %vm783 = vcmp.eq.f32.partialorder %v782, 8.507059e+37
    %v784 = vand.u32 %v771, 2147483648
    %v785 = vor.u32 1.1754944e-38, %v784
    %v786 = vsel %vm783, %v785, %v781
    %v787 = vmul.f32 1.0, %v786
    %v788 = vrcp.pop %v772
    %v789 = vmul.f32 %v772, %v788
    %v790 = vsub.f32 1.0, %v789
    %v791 = vmul.f32 %v788, %v790
    %v792 = vadd.f32 %v788, %v791
    %vm793 = vweird.f32 %v772
    %vm794 = vweird.f32 %v788
    %vm795 = vmor %vm793, %vm794
    %v796 = vsel %vm795, %v788, %v792
    %v797 = vand.u32 2147483647, %v772
    %vm798 = vcmp.eq.f32.partialorder %v797, 8.507059e+37
    %v799 = vand.u32 %v772, 2147483648
    %v800 = vor.u32 1.1754944e-38, %v799
    %v801 = vsel %vm798, %v800, %v796
    %v802 = vmul.f32 1.0, %v801
    %v803 = vmul.f32 %v761, %v787
    %v804 = vmul.f32 %v763, %v802
    %805 = vst [vmem:[#allocation5] sm:$0xff] %v803
    %806 = vst [vmem:[#allocation5 + $0x8] sm:$0xff] %v804
    // Predicated region
    $region26: #{rcnn_forward.1} parent=1 // pred_check
      _
    $region27: #{rcnn_forward.1} parent=1 // pred_check_branch
      %808 = sbr.rel (0) target = $region29
    $region28: #{rcnn_forward.1} parent=1 // pred_region
      %810 = vsyncadd [#allocation6], 0
      %s811 = sshll.u32 [#allocation5], 4
      %s812 = int_to_ptr.vmem [resolvable:$true] %s811
      %s813 = sshll.u32 %s5, 4
      %s814 = int_to_ptr.hbm [resolvable:$true] %s813
      %819 = dma.vmem_to_hbm [thread:$0]  %s812, 256, %s814, [#allocation6], 128, 128, 8
    $region29: #{rcnn_forward.1} parent=1 // pred_fallthru
      _
    // Predicated region
    $region30: #{rcnn_forward.1} parent=1 // pred_check
      _
    $region31: #{rcnn_forward.1} parent=1 // pred_check_branch
      %821 = sbr.rel (0) target = $region33
    $region32: #{rcnn_forward.1} parent=1 // pred_region
      %823 = dma.done [#allocation6], 256
    $region33: #{rcnn_forward.1} parent=1 // pred_fallthru
      _
    %824 = vsyncpa [#allocation6], 1

</llo_original>
